<compile_context>
chip_gen: v7x
topology: tpu7x:2x2x1
jax: 0.10.0
libtpu: 0.0.40
codegen_flags: <defaults>
</compile_context>

<pallas_src>
import jax
import jax.numpy as jnp
from jax.experimental import pallas as pl
from jax.experimental.pallas import tpu as pltpu


def _additive_attention_kernel(cand_ref, w_ref, b_ref, q_ref, out_ref):
    # cand_ref: (BB, S, C) f32   w_ref: (C, Q) bf16   b_ref/q_ref: (1, Q) f32
    # out_ref:  (BB, C) f32
    cand = cand_ref[...]                                     # (BB, S, C)
    BB, S, C = cand.shape
    Q = w_ref.shape[1]

    # (1) Linear projection: one big (BB*S, C) x (C, Q) matmul, bf16 in / f32 acc.
    x2d = cand.reshape(BB * S, C).astype(jnp.bfloat16)
    proj = jnp.dot(x2d, w_ref[...], preferred_element_type=jnp.float32)   # (BB*S, Q)
    temp = jnp.tanh(proj + b_ref[...])                       # f32, bias broadcast

    # (2) scores = temp @ attention_query  -> VPU multiply + lane (XLU) reduce.
    temp3 = temp.reshape(BB, S, Q)
    scores = jnp.sum(temp3 * q_ref[...], axis=-1, keepdims=True)          # (BB, S, 1)

    # (3) softmax over the candidate axis (PyTorch dim=1), per batch row.
    m = jnp.max(scores, axis=1, keepdims=True)               # (BB, 1, 1)
    e = jnp.exp(scores - m)                                   # (BB, S, 1)
    inv = pl.reciprocal(jnp.sum(e, axis=1, keepdims=True), approx=True)    # EUP vrcp
    weights = e * inv                                          # (BB, S, 1)

    # (4) target = weights^T @ candidate_vector per batch -> dense (BB, C) store.
    out_ref[...] = jnp.sum(weights * cand, axis=1).astype(out_ref.dtype)


def _pick_batch_block(B, S, C):
    """Batches per grid step: amortize per-step overhead while staying VMEM-safe."""
    bytes_per_batch = S * C * 4
    # <= ~2 MiB per input buffer (~4 MiB double-buffered): fits v5e's 16 MiB scoped
    # default with headroom, and is tiny next to v7x's 64 MiB physical VMEM.
    bb = max(1, (2 * 1024 * 1024) // max(bytes_per_batch, 1))
    bb = min(bb, B)
    # Keep >= 2 grid steps for larger batches so both v7x TensorCores get work.
    if B >= 16:
        bb = min(bb, pl.cdiv(B, 2))
    # If we are actually blocking the batch, keep the block sublane-aligned (x8) so
    # the (BB, C) output block satisfies the (8, 128) tiling rule and stores densely.
    if bb < B:
        bb = max(8, (bb // 8) * 8)
        bb = min(bb, B)
    return max(bb, 1)


def additive_attention(candidate_vector, linear_w, linear_b, attention_query):
    """
    candidate_vector: (B, S, C) float32
    linear_w:         (Q, C)    float32   (PyTorch nn.Linear weight layout)
    linear_b:         (Q,)      float32
    attention_query:  (Q,)      float32
    returns:          (B, C)    float32
    """
    B, S, C = candidate_vector.shape
    Q = attention_query.shape[0]

    bb = _pick_batch_block(B, S, C)
    n_blocks = pl.cdiv(B, bb)
    Bp = n_blocks * bb
    if Bp != B:
        # Padded rows produce softmax over zeros -> finite weights x zero data -> 0.
        candidate_vector = jnp.pad(candidate_vector, ((0, Bp - B), (0, 0), (0, 0)))

    w_t = linear_w.T.astype(jnp.bfloat16)   # (C, Q): MXU-native bf16, f32 accumulation
    b2d = linear_b.reshape(1, Q).astype(jnp.float32)
    q2d = attention_query.reshape(1, Q).astype(jnp.float32)

    out = pl.pallas_call(
        _additive_attention_kernel,
        out_shape=jax.ShapeDtypeStruct((Bp, C), candidate_vector.dtype),
        grid_spec=pltpu.PrefetchScalarGridSpec(
            num_scalar_prefetch=0,
            grid=(n_blocks,),
            in_specs=[
                pl.BlockSpec((bb, S, C), lambda i: (i, 0, 0)),
                pl.BlockSpec((C, Q), lambda i: (0, 0)),   # weights stay VMEM-resident
                pl.BlockSpec((1, Q), lambda i: (0, 0)),
                pl.BlockSpec((1, Q), lambda i: (0, 0)),
            ],
            out_specs=pl.BlockSpec((bb, C), lambda i: (i, 0)),
        ),
        compiler_params=pltpu.CompilerParams(
            dimension_semantics=("parallel",),
            # Raises v5e's 16 MiB scoped default; matches the v6e default and stays
            # comfortably below v7x's 64 MiB physical VMEM.
            vmem_limit_bytes=32 * 1024 * 1024,
        ),
    )(candidate_vector, w_t, b2d, q2d)

    return out[:B]


def additive_attention_ref(candidate_vector, linear_w, linear_b, attention_query):
    temp = jnp.tanh(candidate_vector @ linear_w.T + linear_b)      # (B, S, Q)
    scores = temp @ attention_query                                # (B, S)
    weights = jax.nn.softmax(scores, axis=1)                       # (B, S)
    return jnp.einsum("bs,bsc->bc", weights, candidate_vector)     # (B, C)


if __name__ == "__main__":
    # B = batch, S = number of candidate vectors, C = candidate_vector_dim,
    # Q = query_vector_dim. B=16 exercises the batch-blocked grid (BB=8, 2 steps).
    B, S, C, Q = 16, 8, 32, 16
    key = jax.random.PRNGKey(0)
    k_x, k_w, k_b, k_q = jax.random.split(key, 4)

    candidate_vector = jax.random.normal(k_x, (B, S, C), dtype=jnp.float32)

    # Deterministic synthetic parameter init (mirrors nn.Linear(C, Q) and
    # attention_query ~ Uniform(-0.1, 0.1)).
    bound = 1.0 / jnp.sqrt(jnp.float32(C))
    linear_w = jax.random.uniform(k_w, (Q, C), minval=-bound, maxval=bound, dtype=jnp.float32)
    linear_b = jax.random.uniform(k_b, (Q,), minval=-bound, maxval=bound, dtype=jnp.float32)
    attention_query = jax.random.uniform(k_q, (Q,), minval=-0.1, maxval=0.1, dtype=jnp.float32)

    out = additive_attention(candidate_vector, linear_w, linear_b, attention_query)
    out = jax.block_until_ready(out)

    ref = additive_attention_ref(candidate_vector, linear_w, linear_b, attention_query)
    assert out.shape == (B, C)
    # Tolerance accounts for bf16 projection inputs and the approximate EUP reciprocal.
    assert jnp.allclose(out, ref, atol=1e-2, rtol=1e-2), "mismatch vs. reference"

    print("KERNEL_OK")
</pallas_src>

<mosaic_0001>
module attributes {stable_mosaic.version = 11 : i64} {
  func.func @_additive_attention_kernel(%arg0: i32, %arg1: memref<8x8x32xf32, #tpu.memory_space<vmem>>, %arg2: memref<32x16xbf16, #tpu.memory_space<vmem>>, %arg3: memref<1x16xf32, #tpu.memory_space<vmem>>, %arg4: memref<1x16xf32, #tpu.memory_space<vmem>>, %arg5: memref<8x32xf32, #tpu.memory_space<vmem>>) attributes {dimension_semantics = [#tpu.dimension_semantics<parallel>], iteration_bounds = array<i64: 2>, scalar_prefetch = 0 : i64, scratch_operands = 0 : i64, tpu.core_type = #tpu.core_type<tc>, window_params = [{transform_indices = @transform_0, window_bounds = array<i64: 8, 8, 32>}, {pipeline_mode = #tpu.pipeline_mode<synchronous>, transform_indices = @transform_1, window_bounds = array<i64: 32, 16>}, {pipeline_mode = #tpu.pipeline_mode<synchronous>, transform_indices = @transform_2, window_bounds = array<i64: 1, 16>}, {pipeline_mode = #tpu.pipeline_mode<synchronous>, transform_indices = @transform_3, window_bounds = array<i64: 1, 16>}, {transform_indices = @transform_4, window_bounds = array<i64: 8, 32>}]} {
    %c0 = arith.constant 0 : index
    %c0_0 = arith.constant 0 : index
    %c0_1 = arith.constant 0 : index
    %0 = vector.load %arg1[%c0, %c0_0, %c0_1] : memref<8x8x32xf32, #tpu.memory_space<vmem>>, vector<8x8x32xf32>
    %1 = vector.shape_cast %0 : vector<8x8x32xf32> to vector<64x32xf32>
    %2 = arith.truncf %1 : vector<64x32xf32> to vector<64x32xbf16>
    %c0_2 = arith.constant 0 : index
    %c0_3 = arith.constant 0 : index
    %3 = vector.load %arg2[%c0_2, %c0_3] : memref<32x16xbf16, #tpu.memory_space<vmem>>, vector<32x16xbf16>
    %cst = arith.constant dense<0.000000e+00> : vector<64x16xf32>
    %4 = tpu.matmul %2, %3, %cst {dimension_numbers = #tpu.dot_dimension_numbers<[1], [0], [0], [1], [0, 0, 1, 1], [], []>} : vector<64x32xbf16>, vector<32x16xbf16>, vector<64x16xf32> -> vector<64x16xf32>
    %c0_4 = arith.constant 0 : index
    %c0_5 = arith.constant 0 : index
    %5 = vector.load %arg3[%c0_4, %c0_5] : memref<1x16xf32, #tpu.memory_space<vmem>>, vector<1x16xf32>
    %6 = vector.broadcast %5 : vector<1x16xf32> to vector<64x16xf32>
    %7 = arith.addf %4, %6 : vector<64x16xf32>
    %8 = math.tanh %7 : vector<64x16xf32>
    %9 = vector.shape_cast %8 : vector<64x16xf32> to vector<8x8x16xf32>
    %c0_6 = arith.constant 0 : index
    %c0_7 = arith.constant 0 : index
    %10 = vector.load %arg4[%c0_6, %c0_7] : memref<1x16xf32, #tpu.memory_space<vmem>>, vector<1x16xf32>
    %11 = vector.shape_cast %10 : vector<1x16xf32> to vector<1x1x16xf32>
    %12 = vector.broadcast %11 : vector<1x1x16xf32> to vector<8x8x16xf32>
    %13 = arith.mulf %9, %12 : vector<8x8x16xf32>
    %cst_8 = arith.constant dense<0.000000e+00> : vector<8x8xf32>
    %14 = vector.multi_reduction <add>, %13, %cst_8 [2] : vector<8x8x16xf32> to vector<8x8xf32>
    %15 = vector.shape_cast %14 : vector<8x8xf32> to vector<8x8x1xf32>
    %cst_9 = arith.constant dense<0xFF800000> : vector<8x1xf32>
    %16 = vector.multi_reduction <maximumf>, %15, %cst_9 [1] : vector<8x8x1xf32> to vector<8x1xf32>
    %17 = vector.shape_cast %16 : vector<8x1xf32> to vector<8x1x1xf32>
    %18 = vector.broadcast %17 : vector<8x1x1xf32> to vector<8x8x1xf32>
    %19 = arith.subf %15, %18 : vector<8x8x1xf32>
    %20 = math.exp %19 : vector<8x8x1xf32>
    %cst_10 = arith.constant dense<0.000000e+00> : vector<8x1xf32>
    %21 = vector.multi_reduction <add>, %20, %cst_10 [1] : vector<8x8x1xf32> to vector<8x1xf32>
    %22 = vector.shape_cast %21 : vector<8x1xf32> to vector<8x1x1xf32>
    %23 = tpu.reciprocal %22 {approx = true} : vector<8x1x1xf32> -> vector<8x1x1xf32>
    %24 = vector.broadcast %23 : vector<8x1x1xf32> to vector<8x8x1xf32>
    %25 = arith.mulf %20, %24 : vector<8x8x1xf32>
    %26 = vector.broadcast %25 : vector<8x8x1xf32> to vector<8x8x32xf32>
    %27 = arith.mulf %26, %0 : vector<8x8x32xf32>
    %cst_11 = arith.constant dense<0.000000e+00> : vector<8x32xf32>
    %28 = vector.multi_reduction <add>, %27, %cst_11 [1] : vector<8x8x32xf32> to vector<8x32xf32>
    %c0_12 = arith.constant 0 : index
    %c0_13 = arith.constant 0 : index
    %29 = vector.load %arg5[%c0_12, %c0_13] : memref<8x32xf32, #tpu.memory_space<vmem>>, vector<8x32xf32>
    tpu.vector_store %arg5[%c0_12, %c0_13], %28 {strides = array<i32>} : memref<8x32xf32, #tpu.memory_space<vmem>>, vector<8x32xf32>,
    return
  }
  func.func @transform_0(%arg0: i32) -> (i32, i32, i32) {
    %c0_i32 = arith.constant 0 : i32
    %c0_i32_0 = arith.constant 0 : i32
    %c0_i32_1 = arith.constant 0 : i32
    return %arg0, %c0_i32, %c0_i32_0 : i32, i32, i32
  }
  func.func @transform_1(%arg0: i32) -> (i32, i32) {
    %c0_i32 = arith.constant 0 : i32
    %c0_i32_0 = arith.constant 0 : i32
    %c0_i32_1 = arith.constant 0 : i32
    return %c0_i32, %c0_i32_0 : i32, i32
  }
  func.func @transform_2(%arg0: i32) -> (i32, i32) {
    %c0_i32 = arith.constant 0 : i32
    %c0_i32_0 = arith.constant 0 : i32
    %c0_i32_1 = arith.constant 0 : i32
    return %c0_i32, %c0_i32_0 : i32, i32
  }
  func.func @transform_3(%arg0: i32) -> (i32, i32) {
    %c0_i32 = arith.constant 0 : i32
    %c0_i32_0 = arith.constant 0 : i32
    %c0_i32_1 = arith.constant 0 : i32
    return %c0_i32, %c0_i32_0 : i32, i32
  }
  func.func @transform_4(%arg0: i32) -> (i32, i32) {
    %c0_i32 = arith.constant 0 : i32
    %c0_i32_0 = arith.constant 0 : i32
    return %arg0, %c0_i32 : i32, i32
  }
}

</mosaic_0001>

<llo_original>
// kernel: tpu_custom_call.1
$region0: #{tpu_custom_call.1}
  #allocation0 [shape = 'u32[]', space=smem, size = 0x4, offset = 0x4, fixed_abs, tag = 'smem constant byte address 0x4 - core index']
  #allocation1 [shape = 'u32[144,128]{1,0:T(1,128)}', space=vmem, size = 0x12000, scoped, tag = 'internal scratch']
  %s0 = inlined_call_operand.hbm [shape: f32[16,8,32], index: 0, kind: input, shape index: {}]
  %s1 = inlined_call_operand.vmem [shape: bf16[32,16], index: 1, kind: input, shape index: {}]
  %s2 = inlined_call_operand.vmem [shape: f32[1,16], index: 2, kind: input, shape index: {}]
  %s3 = inlined_call_operand.vmem [shape: f32[1,16], index: 3, kind: input, shape index: {}]
  %s4 = inlined_call_operand.hbm [shape: f32[16,32], index: 4, kind: output, shape index: {}]
  %s5 = sld [smem:[#allocation0]]
  $region53: #{tpu_custom_call.1} parent=0
    _
  %s7 = ssub.s32 1, %s5
  %s8 = scalar_select 0, %s7, %s5
  $region1: #{tpu_custom_call.1} parent=0
    #allocation2 [shape = 'u8[65536]{0}', space=vmem, size = 0x10000, scoped, tag = 'input window, operand 0']
    #allocation3 [shape = 's32[2]{0}', space=sflag, size = 0x8, scoped, tag = 'scoped memory for tpu_custom_call.1']
    #allocation4 [shape = 's32[2]{0}', space=sflag, size = 0x8, scoped, tag = 'scoped memory for tpu_custom_call.1']
    #allocation5 [shape = 'u8[8192]{0}', space=vmem, size = 0x2000, scoped, tag = 'output window, operand 0']
    %9 = vsyncpa [#allocation3], 0
    %s10 = scalar_lea.sflag [#allocation3], 1
    %11 = vsyncpa %s10, 0
    %12 = vsyncpa [#allocation4], 0
    %s13 = scalar_lea.sflag [#allocation4], 1
    %14 = vsyncpa %s13, 0
    loop: start=0, step=1, limit=4
    $region2: #{tpu_custom_call.1} parent=1 // loop_pre_header
      _
    $region3: #{tpu_custom_call.1} parent=1 // loop_header
      %s16 = sphi 0, %s20
      %p17 = scmp.ge.s32.totalorder %s16, 4
      %s26 = sphi 0, %s28
      %s29 = sphi 0, %s26
      %s30 = sphi 0, %s29
      %s46 = sphi 0, %s30
      %s50 = sphi 0, %s50
      %s52 = sphi 0, %s50
      %s53 = sphi 0, %s52
      %s67 = sphi 0, %s53
      %s71 = sphi 0, %s71
      %s73 = sphi 0, %s71
      %s74 = sphi 0, %s73
      %s88 = sphi 0, %s74
      %s92 = sphi 0, %s92
      %s94 = sphi 0, %s92
      %s95 = sphi 0, %s94
      %s109 = sphi 0, %s95
      %s115 = sphi 0, %s117
      %s118 = sphi 0, %s115
      %s119 = sphi 0, %s118
      %s135 = sphi 0, %s119
    $region4: #{tpu_custom_call.1} parent=1 // loop_header_branch
      %19 = sbr.rel (%p17) target = $region8
    $region5: #{tpu_custom_call.1} parent=1 // loop_body
      %s21 = ssub.s32 %s16, 1
      %s22 = ssub.s32 %s16, 2
      %s23 = sadd.s32 %s16, 1
      %s24 = ssub.s32 %s16, %s23
      %p25 = scmp.eq.s32.totalorder %s24, 0
      %s27 = sadd.s32 %s26, 1
      %s28 = scalar_select %p25, %s26, %s27
      %p31 = pneg %p25
      %p32 = scmp.eq.s32.totalorder %s16, 1
      %p33 = por %p31, %p32
      %p34 = scmp.ne.s32.totalorder %s26, %s29
      %p35 = scmp.eq.s32.totalorder %s16, 0
      %p36 = por %p34, %p35
      %p37 = scmp.ne.s32.totalorder %s26, %s29
      %p38 = scmp.eq.s32.totalorder %s21, 1
      %p39 = por %p37, %p38
      %p40 = scmp.ne.s32.totalorder %s29, %s30
      %p41 = scmp.eq.s32.totalorder %s21, 0
      %p42 = por %p40, %p41
      %p43 = scmp.ne.s32.totalorder %s29, %s30
      %p44 = scmp.eq.s32.totalorder %s22, 1
      %p45 = por %p43, %p44
      %p47 = scmp.ne.s32.totalorder %s30, %s46
      %p48 = scmp.eq.s32.totalorder %s22, 0
      %p49 = por %p47, %p48
      %s51 = sadd.s32 %s50, 1
      %p54 = scmp.eq.s32.totalorder %s16, 1
      %p55 = scmp.ne.s32.totalorder %s50, %s52
      %p56 = scmp.eq.s32.totalorder %s16, 0
      %p57 = por %p55, %p56
      %p58 = scmp.ne.s32.totalorder %s50, %s52
      %p59 = scmp.eq.s32.totalorder %s21, 1
      %p60 = por %p58, %p59
      %p61 = scmp.ne.s32.totalorder %s52, %s53
      %p62 = scmp.eq.s32.totalorder %s21, 0
      %p63 = por %p61, %p62
      %p64 = scmp.ne.s32.totalorder %s52, %s53
      %p65 = scmp.eq.s32.totalorder %s22, 1
      %p66 = por %p64, %p65
      %p68 = scmp.ne.s32.totalorder %s53, %s67
      %p69 = scmp.eq.s32.totalorder %s22, 0
      %p70 = por %p68, %p69
      %s72 = sadd.s32 %s71, 1
      %p75 = scmp.eq.s32.totalorder %s16, 1
      %p76 = scmp.ne.s32.totalorder %s71, %s73
      %p77 = scmp.eq.s32.totalorder %s16, 0
      %p78 = por %p76, %p77
      %p79 = scmp.ne.s32.totalorder %s71, %s73
      %p80 = scmp.eq.s32.totalorder %s21, 1
      %p81 = por %p79, %p80
      %p82 = scmp.ne.s32.totalorder %s73, %s74
      %p83 = scmp.eq.s32.totalorder %s21, 0
      %p84 = por %p82, %p83
      %p85 = scmp.ne.s32.totalorder %s73, %s74
      %p86 = scmp.eq.s32.totalorder %s22, 1
      %p87 = por %p85, %p86
      %p89 = scmp.ne.s32.totalorder %s74, %s88
      %p90 = scmp.eq.s32.totalorder %s22, 0
      %p91 = por %p89, %p90
      %s93 = sadd.s32 %s92, 1
      %p96 = scmp.eq.s32.totalorder %s16, 1
      %p97 = scmp.ne.s32.totalorder %s92, %s94
      %p98 = scmp.eq.s32.totalorder %s16, 0
      %p99 = por %p97, %p98
      %p100 = scmp.ne.s32.totalorder %s92, %s94
      %p101 = scmp.eq.s32.totalorder %s21, 1
      %p102 = por %p100, %p101
      %p103 = scmp.ne.s32.totalorder %s94, %s95
      %p104 = scmp.eq.s32.totalorder %s21, 0
      %p105 = por %p103, %p104
      %p106 = scmp.ne.s32.totalorder %s94, %s95
      %p107 = scmp.eq.s32.totalorder %s22, 1
      %p108 = por %p106, %p107
      %p110 = scmp.ne.s32.totalorder %s95, %s109
      %p111 = scmp.eq.s32.totalorder %s22, 0
      %p112 = por %p110, %p111
      %s113 = ssub.s32 %s16, %s23
      %p114 = scmp.eq.s32.totalorder %s113, 0
      %s116 = sadd.s32 %s115, 1
      %s117 = scalar_select %p114, %s115, %s116
      %p120 = pneg %p114
      %p121 = scmp.eq.s32.totalorder %s16, 1
      %p122 = por %p120, %p121
      %p123 = scmp.ne.s32.totalorder %s115, %s118
      %p124 = scmp.eq.s32.totalorder %s16, 0
      %p125 = por %p123, %p124
      %p126 = scmp.ne.s32.totalorder %s115, %s118
      %p127 = scmp.eq.s32.totalorder %s21, 1
      %p128 = por %p126, %p127
      %p129 = scmp.ne.s32.totalorder %s118, %s119
      %p130 = scmp.eq.s32.totalorder %s21, 0
      %p131 = por %p129, %p130
      %p132 = scmp.ne.s32.totalorder %s118, %s119
      %p133 = scmp.eq.s32.totalorder %s22, 1
      %p134 = por %p132, %p133
      %p136 = scmp.ne.s32.totalorder %s119, %s135
      %p137 = scmp.eq.s32.totalorder %s22, 0
      %p138 = por %p136, %p137
      %p139 = scmp.le.s32.totalorder 1, %s16
      %p140 = scmp.lt.s32.totalorder %s16, 3
      %p141 = pnand %p139, %p140
      %p142 = pneg %p141
      // Predicated region
      $region9: #{tpu_custom_call.1} parent=5 // pred_check
        _
      $region10: #{tpu_custom_call.1} parent=5 // pred_check_branch
        %144 = sbr.rel (%p141) target = $region12
      $region11: #{tpu_custom_call.1} parent=5 // pred_region
        %s145 = ssub.s32 %s16, 1
        // Predicated region
        $region13: #{tpu_custom_call.1} parent=11 // pred_check
          %p146 = pneg %p63
        $region14: #{tpu_custom_call.1} parent=11 // pred_check_branch
          %148 = sbr.rel (%p146) target = $region16
        $region15: #{tpu_custom_call.1} parent=11 // pred_region
          _
        $region16: #{tpu_custom_call.1} parent=11 // pred_fallthru
          _
        // Predicated region
        $region17: #{tpu_custom_call.1} parent=11 // pred_check
          %p149 = pneg %p84
        $region18: #{tpu_custom_call.1} parent=11 // pred_check_branch
          %151 = sbr.rel (%p149) target = $region20
        $region19: #{tpu_custom_call.1} parent=11 // pred_region
          _
        $region20: #{tpu_custom_call.1} parent=11 // pred_fallthru
          _
        // Predicated region
        $region21: #{tpu_custom_call.1} parent=11 // pred_check
          %p152 = pneg %p105
        $region22: #{tpu_custom_call.1} parent=11 // pred_check_branch
          %154 = sbr.rel (%p152) target = $region24
        $region23: #{tpu_custom_call.1} parent=11 // pred_region
          _
        $region24: #{tpu_custom_call.1} parent=11 // pred_fallthru
          _
      $region12: #{tpu_custom_call.1} parent=5 // pred_fallthru
        _
      %p155 = scmp.lt.s32.totalorder %s16, 2
      // Predicated region
      $region25: #{tpu_custom_call.1} parent=5 // pred_check
        %p156 = pneg %p155
      $region26: #{tpu_custom_call.1} parent=5 // pred_check_branch
        %158 = sbr.rel (%p156) target = $region28
      $region27: #{tpu_custom_call.1} parent=5 // pred_region
        // Predicated region
        $region29: #{tpu_custom_call.1} parent=27 // pred_check
          %p159 = pneg %p36
        $region30: #{tpu_custom_call.1} parent=27 // pred_check_branch
          %161 = sbr.rel (%p159) target = $region32
        $region31: #{tpu_custom_call.1} parent=27 // pred_region
          %s162 = sand.u32 %s26, 1
          %s163 = scalar_lea.sflag [#allocation3], %s162
          %s164 = sand.u32 %s26, 1
          %s165 = smul.addr %s164, 64
          %s166 = scalar_lea.vmem [#allocation2], %s165
          %s167 = smul.u32 8, %s16
          %s169 = ssub.s32 1024, 1024
          %170 = vsyncadd %s163, %s169
          %s171 = smul.addr %s167, 128
          %s172 = scalar_lea.hbm %s0, %s171
          %s173 = sshll.u32 %s166, 4
          %s174 = int_to_ptr.vmem [resolvable:$true] %s173
          %179 = dma.hbm_to_vmem [thread:$0]  %s172, 1024, %s174, %s163, 128, 128, 8
        $region32: #{tpu_custom_call.1} parent=27 // pred_fallthru
          _
      $region28: #{tpu_custom_call.1} parent=5 // pred_fallthru
        _
      %p180 = scmp.le.s32.totalorder 1, %s16
      %p181 = scmp.lt.s32.totalorder %s16, 3
      %p182 = pnand %p180, %p181
      %p183 = pneg %p182
      // Predicated region
      $region33: #{tpu_custom_call.1} parent=5 // pred_check
        _
      $region34: #{tpu_custom_call.1} parent=5 // pred_check_branch
        %185 = sbr.rel (%p182) target = $region36
      $region35: #{tpu_custom_call.1} parent=5 // pred_region
        %s186 = ssub.s32 %s16, 1
        %s187 = sand.u32 %s29, 1
        %s188 = scalar_lea.sflag [#allocation3], %s187
        %s189 = sand.u32 %s29, 1
        %s190 = smul.addr %s189, 64
        %s191 = scalar_lea.vmem [#allocation2], %s190
        // Predicated region
        $region37: #{tpu_custom_call.1} parent=35 // pred_check
          %p192 = pneg %p42
        $region38: #{tpu_custom_call.1} parent=35 // pred_check_branch
          %194 = sbr.rel (%p192) target = $region40
        $region39: #{tpu_custom_call.1} parent=35 // pred_region
          %195 = dma.done %s188, 1024
        $region40: #{tpu_custom_call.1} parent=35 // pred_fallthru
          _
        %s196 = sand.u32 %s29, 1
        %s197 = scalar_lea.sflag [#allocation3], %s196
        %s198 = sand.u32 %s29, 1
        %s199 = smul.addr %s198, 64
        %s200 = scalar_lea.vmem [#allocation2], %s199
        %p201 = pneg %p42
        %p202 = pneg %p39
        %p203 = pneg %p63
        %p204 = pneg %p60
        %p205 = pneg %p84
        %p206 = pneg %p81
        %p207 = pneg %p105
        %p208 = pneg %p102
        %p209 = pneg %p131
        %p210 = pneg %p128
        %s211 = sand.u32 %s118, 1
        %s212 = scalar_lea.sflag [#allocation4], %s211
        %s213 = sand.u32 %s118, 1
        %s214 = smul.addr %s213, 8
        %s215 = scalar_lea.vmem [#allocation5], %s214
        %s216 = smul.u32 8, %s21
        %v218 = vld [vmem:[%s191] sm:$0xff]
        %v219 = vld [vmem:[%s191 + $0x8] sm:$0xff]
        %v220 = vld [vmem:[%s191 + $0x10] sm:$0xff]
        %v221 = vld [vmem:[%s191 + $0x18] sm:$0xff]
        %v222 = vld [vmem:[%s191 + $0x20] sm:$0xff]
        %v223 = vld [vmem:[%s191 + $0x28] sm:$0xff]
        %v224 = vld [vmem:[%s191 + $0x30] sm:$0xff]
        %v225 = vld [vmem:[%s191 + $0x38] sm:$0xff]
        %v226 = vpack.c.bf16 %v219, %v218
        %v227 = vpack.c.bf16 %v221, %v220
        %v228 = vpack.c.bf16 %v223, %v222
        %v229 = vpack.c.bf16 %v225, %v224
        %v230 = vld [vmem:[%s1] sm:$0xf]
        %v231 = vld [vmem:[%s1 + $0x4] sm:$0xf]
        %v232 = vld [vmem:[%s1 + $0x8] sm:$0xf]
        %v233 = vld [vmem:[%s1 + $0xc] sm:$0xf]
        %v234 = vld [vmem:[%s2] sm:$0x1]
        %v236 = vlaneseq
        %v237 = vshrl.u32 %v236, 7
        %v238 = vsub.s32 0, %v237
        %v239 = vrot.slane %v234, %v238
        %v245 = vunpack.c.l.b16 %v230
        %v246 = vunpack.c.l.b16 %v231
        %v247 = vunpack.c.l.b16 %v232
        %v248 = vunpack.c.l.b16 %v233
        %v249 = vpack.c.b16 %v246, %v245
        %v250 = vpack.c.b16 %v248, %v247
        %vm253 = vcmask 261120
        %v255 = vsel %vm253, %v226, 0
        %v258 = vsel %vm253, %v227, 0
        %v261 = vsel %vm253, %v228, 0
        %v264 = vsel %vm253, %v229, 0
        %266 = vmatprep.subr.bf16.mxu0 0
        %267 = vmatpush1.bf16.msra.mxu0 %v249
        %268 = vmatprep.subr.bf16.mxu0 0
        %269 = vmatpush1.bf16.msra.mxu0 %v250
        %270 = vmatprep.subr.bf16.mxu0 0
        %271 = vmatpush1.bf16.msra.mxu0 0
        %272 = vmatprep.subr.bf16.mxu0 0
        %273 = vmatpush1.bf16.msra.mxu0 0
        %274 = vmatprep.subr.bf16.mxu0 0
        %275 = vmatpush1.bf16.msra.mxu0 0
        %276 = vmatprep.subr.bf16.mxu0 0
        %277 = vmatpush1.bf16.msra.mxu0 0
        %278 = vmatprep.subr.bf16.mxu0 0
        %279 = vmatpush1.bf16.msra.mxu0 0
        %280 = vmatprep.subr.bf16.mxu0 0
        %281 = vmatpush1.bf16.msra.mxu0 0
        %282 = vmatprep.subr.bf16.mxu0 0
        %283 = vmatpush1.bf16.msra.mxu0 0
        %284 = vmatprep.subr.bf16.mxu0 0
        %285 = vmatpush1.bf16.msra.mxu0 0
        %286 = vmatprep.subr.bf16.mxu0 0
        %287 = vmatpush1.bf16.msra.mxu0 0
        %288 = vmatprep.subr.bf16.mxu0 0
        %289 = vmatpush1.bf16.msra.mxu0 0
        %290 = vmatprep.subr.bf16.mxu0 0
        %291 = vmatpush1.bf16.msra.mxu0 0
        %292 = vmatprep.subr.bf16.mxu0 0
        %293 = vmatpush1.bf16.msra.mxu0 0
        %294 = vmatprep.subr.bf16.mxu0 0
        %295 = vmatpush1.bf16.msra.mxu0 0
        %296 = vmatprep.subr.bf16.mxu0 0
        %297 = vmatpush1.bf16.msra.mxu0 0
        %298 = vmatprep.mubr.bf16.mxu0 0
        %299 = vmatmul.mubr.bf16.gmra.mrb[0].mxu0 %v255
        %v300 = vpop.f32.mrb[0].mxu0
        %v301 = vadd.f32 %v239, %v300
        %v302 = vpop.f32.mrb[0].mxu0
        %v303 = vpop.f32.mrb[0].mxu0
        %v304 = vadd.f32 %v239, %v303
        %v305 = vpop.f32.mrb[0].mxu0
        %306 = vmatprep.mubr.bf16.mxu0 0
        %307 = vmatmul.mubr.bf16.gmra.mrb[0].mxu0 %v258
        %v308 = vpop.f32.mrb[0].mxu0
        %v309 = vadd.f32 %v239, %v308
        %v310 = vpop.f32.mrb[0].mxu0
        %v311 = vpop.f32.mrb[0].mxu0
        %v312 = vadd.f32 %v239, %v311
        %v313 = vpop.f32.mrb[0].mxu0
        %314 = vmatprep.mubr.bf16.mxu0 0
        %315 = vmatmul.mubr.bf16.gmra.mrb[0].mxu0 %v261
        %v316 = vpop.f32.mrb[0].mxu0
        %v317 = vadd.f32 %v239, %v316
        %v318 = vpop.f32.mrb[0].mxu0
        %v319 = vpop.f32.mrb[0].mxu0
        %v320 = vadd.f32 %v239, %v319
        %v321 = vpop.f32.mrb[0].mxu0
        %322 = vmatprep.mubr.bf16.mxu0 0
        %323 = vmatmul.mubr.bf16.gmra.mrb[0].mxu0 %v264
        %v324 = vpop.f32.mrb[0].mxu0
        %v325 = vadd.f32 %v239, %v324
        %v326 = vpop.f32.mrb[0].mxu0
        %v327 = vpop.f32.mrb[0].mxu0
        %v328 = vadd.f32 %v239, %v327
        %v329 = vpop.f32.mrb[0].mxu0
        %330 = vdwg.mxu0
        %v331 = vtanh.pop %v301
        %v332 = vtanh.pop %v304
        %v333 = vtanh.pop %v309
        %v334 = vtanh.pop %v312
        %v335 = vtanh.pop %v317
        %v336 = vtanh.pop %v320
        %v337 = vtanh.pop %v325
        %v338 = vtanh.pop %v328
        %v339 = vld [vmem:[%s3] sm:$0x1]
        %v341 = vlaneseq
        %v342 = vshrl.u32 %v341, 7
        %v343 = vsub.s32 0, %v342
        %v344 = vrot.slane %v339, %v343
        %v346 = vmul.f32 %v331, %v344
        %v347 = vmul.f32 %v332, %v344
        %v348 = vmul.f32 %v333, %v344
        %v349 = vmul.f32 %v334, %v344
        %v350 = vmul.f32 %v335, %v344
        %v351 = vmul.f32 %v336, %v344
        %v352 = vmul.f32 %v337, %v344
        %v353 = vmul.f32 %v338, %v344
        %vm354 = vcmask 130048
        %v355 = vsel %vm354, %v346, 0.0
        %356 = vadd.xlane.f32.xlu0 %v355
        %v357 = vpop.xlane.xlu0 %356
        %v358 = vsel %vm354, %v347, 0.0
        %359 = vadd.xlane.f32.xlu0 %v358
        %v360 = vpop.xlane.xlu0 %359
        %v361 = vsel %vm354, %v348, 0.0
        %362 = vadd.xlane.f32.xlu0 %v361
        %v363 = vpop.xlane.xlu0 %362
        %v364 = vsel %vm354, %v349, 0.0
        %365 = vadd.xlane.f32.xlu0 %v364
        %v366 = vpop.xlane.xlu0 %365
        %v367 = vsel %vm354, %v350, 0.0
        %368 = vadd.xlane.f32.xlu0 %v367
        %v369 = vpop.xlane.xlu0 %368
        %v370 = vsel %vm354, %v351, 0.0
        %371 = vadd.xlane.f32.xlu0 %v370
        %v372 = vpop.xlane.xlu0 %371
        %v373 = vsel %vm354, %v352, 0.0
        %374 = vadd.xlane.f32.xlu0 %v373
        %v375 = vpop.xlane.xlu0 %374
        %v376 = vsel %vm354, %v353, 0.0
        %377 = vadd.xlane.f32.xlu0 %v376
        %v378 = vpop.xlane.xlu0 %377
        %v379 = vrot.slane %v357, 4
        %v380 = vmax.f32 %v357, %v379
        %v381 = vrot.slane %v380, 2
        %v382 = vmax.f32 %v380, %v381
        %v383 = vrot.slane %v382, 1
        %v384 = vmax.f32 %v382, %v383
        %v385 = vrot.slane %v360, 4
        %v386 = vmax.f32 %v360, %v385
        %v387 = vrot.slane %v386, 2
        %v388 = vmax.f32 %v386, %v387
        %v389 = vrot.slane %v388, 1
        %v390 = vmax.f32 %v388, %v389
        %v391 = vrot.slane %v363, 4
        %v392 = vmax.f32 %v363, %v391
        %v393 = vrot.slane %v392, 2
        %v394 = vmax.f32 %v392, %v393
        %v395 = vrot.slane %v394, 1
        %v396 = vmax.f32 %v394, %v395
        %v397 = vrot.slane %v366, 4
        %v398 = vmax.f32 %v366, %v397
        %v399 = vrot.slane %v398, 2
        %v400 = vmax.f32 %v398, %v399
        %v401 = vrot.slane %v400, 1
        %v402 = vmax.f32 %v400, %v401
        %v403 = vrot.slane %v369, 4
        %v404 = vmax.f32 %v369, %v403
        %v405 = vrot.slane %v404, 2
        %v406 = vmax.f32 %v404, %v405
        %v407 = vrot.slane %v406, 1
        %v408 = vmax.f32 %v406, %v407
        %v409 = vrot.slane %v372, 4
        %v410 = vmax.f32 %v372, %v409
        %v411 = vrot.slane %v410, 2
        %v412 = vmax.f32 %v410, %v411
        %v413 = vrot.slane %v412, 1
        %v414 = vmax.f32 %v412, %v413
        %v415 = vrot.slane %v375, 4
        %v416 = vmax.f32 %v375, %v415
        %v417 = vrot.slane %v416, 2
        %v418 = vmax.f32 %v416, %v417
        %v419 = vrot.slane %v418, 1
        %v420 = vmax.f32 %v418, %v419
        %v421 = vrot.slane %v378, 4
        %v422 = vmax.f32 %v378, %v421
        %v423 = vrot.slane %v422, 2
        %v424 = vmax.f32 %v422, %v423
        %v425 = vrot.slane %v424, 1
        %v426 = vmax.f32 %v424, %v425
        %v427 = vsub.f32 %v357, %v384
        %v428 = vsub.f32 %v360, %v390
        %v429 = vsub.f32 %v363, %v396
        %v430 = vsub.f32 %v366, %v402
        %v431 = vsub.f32 %v369, %v408
        %v432 = vsub.f32 %v372, %v414
        %v433 = vsub.f32 %v375, %v420
        %v434 = vsub.f32 %v378, %v426
        %v435 = vmul.f32 %v427, 1.442695
        %v436 = vpow.pop %v435
        %v437 = vmul.f32 %v428, 1.442695
        %v438 = vpow.pop %v437
        %v439 = vmul.f32 %v429, 1.442695
        %v440 = vpow.pop %v439
        %v441 = vmul.f32 %v430, 1.442695
        %v442 = vpow.pop %v441
        %v443 = vmul.f32 %v431, 1.442695
        %v444 = vpow.pop %v443
        %v445 = vmul.f32 %v432, 1.442695
        %v446 = vpow.pop %v445
        %v447 = vmul.f32 %v433, 1.442695
        %v448 = vpow.pop %v447
        %v449 = vmul.f32 %v434, 1.442695
        %v450 = vpow.pop %v449
        %v451 = vrot.slane %v436, 4
        %v452 = vadd.f32 %v436, %v451
        %v453 = vrot.slane %v452, 2
        %v454 = vadd.f32 %v452, %v453
        %v455 = vrot.slane %v454, 1
        %v456 = vadd.f32 %v454, %v455
        %v457 = vrot.slane %v438, 4
        %v458 = vadd.f32 %v438, %v457
        %v459 = vrot.slane %v458, 2
        %v460 = vadd.f32 %v458, %v459
        %v461 = vrot.slane %v460, 1
        %v462 = vadd.f32 %v460, %v461
        %v463 = vrot.slane %v440, 4
        %v464 = vadd.f32 %v440, %v463
        %v465 = vrot.slane %v464, 2
        %v466 = vadd.f32 %v464, %v465
        %v467 = vrot.slane %v466, 1
        %v468 = vadd.f32 %v466, %v467
        %v469 = vrot.slane %v442, 4
        %v470 = vadd.f32 %v442, %v469
        %v471 = vrot.slane %v470, 2
        %v472 = vadd.f32 %v470, %v471
        %v473 = vrot.slane %v472, 1
        %v474 = vadd.f32 %v472, %v473
        %v475 = vrot.slane %v444, 4
        %v476 = vadd.f32 %v444, %v475
        %v477 = vrot.slane %v476, 2
        %v478 = vadd.f32 %v476, %v477
        %v479 = vrot.slane %v478, 1
        %v480 = vadd.f32 %v478, %v479
        %v481 = vrot.slane %v446, 4
        %v482 = vadd.f32 %v446, %v481
        %v483 = vrot.slane %v482, 2
        %v484 = vadd.f32 %v482, %v483
        %v485 = vrot.slane %v484, 1
        %v486 = vadd.f32 %v484, %v485
        %v487 = vrot.slane %v448, 4
        %v488 = vadd.f32 %v448, %v487
        %v489 = vrot.slane %v488, 2
        %v490 = vadd.f32 %v488, %v489
        %v491 = vrot.slane %v490, 1
        %v492 = vadd.f32 %v490, %v491
        %v493 = vrot.slane %v450, 4
        %v494 = vadd.f32 %v450, %v493
        %v495 = vrot.slane %v494, 2
        %v496 = vadd.f32 %v494, %v495
        %v497 = vrot.slane %v496, 1
        %v498 = vadd.f32 %v496, %v497
        %v499 = vrcp.pop %v456
        %v500 = vrcp.pop %v462
        %v501 = vrcp.pop %v468
        %v502 = vrcp.pop %v474
        %v503 = vrcp.pop %v480
        %v504 = vrcp.pop %v486
        %v505 = vrcp.pop %v492
        %v506 = vrcp.pop %v498
        %v507 = vmul.f32 %v436, %v499
        %v508 = vmul.f32 %v438, %v500
        %v509 = vmul.f32 %v440, %v501
        %v510 = vmul.f32 %v442, %v502
        %v511 = vmul.f32 %v444, %v503
        %v512 = vmul.f32 %v446, %v504
        %v513 = vmul.f32 %v448, %v505
        %v514 = vmul.f32 %v450, %v506
        %v515 = vmul.f32 %v507, %v218
        %v516 = vmul.f32 %v508, %v219
        %v517 = vmul.f32 %v509, %v220
        %v518 = vmul.f32 %v510, %v221
        %v519 = vmul.f32 %v511, %v222
        %v520 = vmul.f32 %v512, %v223
        %v521 = vmul.f32 %v513, %v224
        %v522 = vmul.f32 %v514, %v225
        %v523 = vsel %vm253, %v515, 0.0
        %v524 = vrot.slane %v523, 4
        %v525 = vadd.f32 %v523, %v524
        %v526 = vrot.slane %v525, 2
        %v527 = vadd.f32 %v525, %v526
        %v528 = vrot.slane %v527, 1
        %v529 = vadd.f32 %v527, %v528
        %v530 = vsel %vm253, %v516, 0.0
        %v531 = vrot.slane %v530, 4
        %v532 = vadd.f32 %v530, %v531
        %v533 = vrot.slane %v532, 2
        %v534 = vadd.f32 %v532, %v533
        %v535 = vrot.slane %v534, 1
        %v536 = vadd.f32 %v534, %v535
        %v537 = vsel %vm253, %v517, 0.0
        %v538 = vrot.slane %v537, 4
        %v539 = vadd.f32 %v537, %v538
        %v540 = vrot.slane %v539, 2
        %v541 = vadd.f32 %v539, %v540
        %v542 = vrot.slane %v541, 1
        %v543 = vadd.f32 %v541, %v542
        %v544 = vsel %vm253, %v518, 0.0
        %v545 = vrot.slane %v544, 4
        %v546 = vadd.f32 %v544, %v545
        %v547 = vrot.slane %v546, 2
        %v548 = vadd.f32 %v546, %v547
        %v549 = vrot.slane %v548, 1
        %v550 = vadd.f32 %v548, %v549
        %v551 = vsel %vm253, %v519, 0.0
        %v552 = vrot.slane %v551, 4
        %v553 = vadd.f32 %v551, %v552
        %v554 = vrot.slane %v553, 2
        %v555 = vadd.f32 %v553, %v554
        %v556 = vrot.slane %v555, 1
        %v557 = vadd.f32 %v555, %v556
        %v558 = vsel %vm253, %v520, 0.0
        %v559 = vrot.slane %v558, 4
        %v560 = vadd.f32 %v558, %v559
        %v561 = vrot.slane %v560, 2
        %v562 = vadd.f32 %v560, %v561
        %v563 = vrot.slane %v562, 1
        %v564 = vadd.f32 %v562, %v563
        %v565 = vsel %vm253, %v521, 0.0
        %v566 = vrot.slane %v565, 4
        %v567 = vadd.f32 %v565, %v566
        %v568 = vrot.slane %v567, 2
        %v569 = vadd.f32 %v567, %v568
        %v570 = vrot.slane %v569, 1
        %v571 = vadd.f32 %v569, %v570
        %v572 = vsel %vm253, %v522, 0.0
        %v573 = vrot.slane %v572, 4
        %v574 = vadd.f32 %v572, %v573
        %v575 = vrot.slane %v574, 2
        %v576 = vadd.f32 %v574, %v575
        %v577 = vrot.slane %v576, 1
        %v578 = vadd.f32 %v576, %v577
        %vm587 = vcmask 1041409
        %v588 = vsel %vm587, %v536, %v529
        %vm589 = vcmask 1042434
        %v590 = vsel %vm589, %v543, %v588
        %vm591 = vcmask 1043459
        %v592 = vsel %vm591, %v550, %v590
        %vm593 = vcmask 1044484
        %v594 = vsel %vm593, %v557, %v592
        %vm595 = vcmask 1045509
        %v596 = vsel %vm595, %v564, %v594
        %vm597 = vcmask 1046534
        %v598 = vsel %vm597, %v571, %v596
        %vm599 = vcmask 1047559
        %v600 = vsel %vm599, %v578, %v598
        %602 = vst.msk [vmem:[%s215] sm:$0xff] %vm253, %v600
        %s603 = sand.u32 %s118, 1
        %s604 = scalar_lea.sflag [#allocation4], %s603
        %s605 = sand.u32 %s118, 1
        %s606 = smul.addr %s605, 8
        %s607 = scalar_lea.vmem [#allocation5], %s606
        // Predicated region
        $region41: #{tpu_custom_call.1} parent=35 // pred_check
          %p608 = pneg %p128
        $region42: #{tpu_custom_call.1} parent=35 // pred_check_branch
          %610 = sbr.rel (%p608) target = $region44
        $region43: #{tpu_custom_call.1} parent=35 // pred_region
          %s612 = ssub.s32 128, 128
          %613 = vsyncadd %s604, %s612
          %s614 = smul.addr %s21, 128
          %s615 = scalar_lea.hbm %s4, %s614
          %s617 = sshll.u32 %s607, 4
          %s618 = int_to_ptr.vmem [resolvable:$true] %s617
          %620 = dma.vmem_to_hbm [thread:$0]  %s618, 128, %s615, %s604
        $region44: #{tpu_custom_call.1} parent=35 // pred_fallthru
          _
      $region36: #{tpu_custom_call.1} parent=5 // pred_fallthru
        _
      %p621 = scmp.le.s32.totalorder 2, %s16
      // Predicated region
      $region45: #{tpu_custom_call.1} parent=5 // pred_check
        %p622 = pneg %p621
      $region46: #{tpu_custom_call.1} parent=5 // pred_check_branch
        %624 = sbr.rel (%p622) target = $region48
      $region47: #{tpu_custom_call.1} parent=5 // pred_region
        %s625 = ssub.s32 %s16, 2
        // Predicated region
        $region49: #{tpu_custom_call.1} parent=47 // pred_check
          %p626 = pneg %p134
        $region50: #{tpu_custom_call.1} parent=47 // pred_check_branch
          %628 = sbr.rel (%p626) target = $region52
        $region51: #{tpu_custom_call.1} parent=47 // pred_region
          %s629 = sand.u32 %s119, 1
          %s630 = scalar_lea.sflag [#allocation4], %s629
          %s631 = sand.u32 %s119, 1
          %s632 = smul.addr %s631, 8
          %s633 = scalar_lea.vmem [#allocation5], %s632
          %634 = dma.done %s630, 128
        $region52: #{tpu_custom_call.1} parent=47 // pred_fallthru
          _
      $region48: #{tpu_custom_call.1} parent=5 // pred_fallthru
        _
    $region6: #{tpu_custom_call.1} parent=1 // loop_footer
      %s20 = sadd.s32 1, %s16
    $region7: #{tpu_custom_call.1} parent=1 // loop_footer_branch
      %15 = sbr.rel target = $region3
    $region8: #{tpu_custom_call.1} parent=1 // loop_exit
      _
    %635 = vsyncpa [#allocation3], 1
    %s636 = scalar_lea.sflag [#allocation3], 1
    %637 = vsyncpa %s636, 1
    %638 = vsyncpa [#allocation4], 1
    %s639 = scalar_lea.sflag [#allocation4], 1
    %640 = vsyncpa %s639, 1

</llo_original>
